<compile_context>
chip_gen: v7x
topology: tpu7x:2x2x1
jax: 0.10.0
libtpu: 0.0.40
codegen_flags: <defaults>
</compile_context>

<pallas_src>
import jax
import jax.numpy as jnp
from jax.experimental import pallas as pl
from jax.experimental.pallas import tpu as pltpu

HEIGHT = 2   # number of fused feature maps (module default height=2)
KSIZE = 3    # Conv1d kernel size (padding = KSIZE // 2 = 1)

_STEP_TRAFFIC_TARGET = 8 * 1024 * 1024    # aim for >= ~8 MiB of HBM traffic per grid step


def _vmem_capacity_bytes():
    """Physical VMEM per TensorCore (generation-aware), conservative fallback."""
    try:
        info = pltpu.get_tpu_info()
        cap = getattr(info, "vmem_capacity_bytes", None)
        if cap:
            return int(cap)
    except Exception:
        pass
    return 64 * 1024 * 1024               # v7x-sized fallback, safe on every part


def _conv_band_matrices(weight, c):
    """Conv1d(1, HEIGHT, KSIZE, padding=KSIZE//2) over channels as HEIGHT banded
    (C, C) matrices M_i with logits_i = M_i @ pooled (pooled as a (C, 1) column)."""
    w = weight.reshape(HEIGHT, KSIZE).astype(jnp.float32)
    ch = jnp.arange(c)[:, None]
    r = jnp.arange(c)[None, :]
    pad = KSIZE // 2
    mats = []
    for i in range(HEIGHT):
        m = jnp.zeros((c, c), jnp.float32)
        for k in range(KSIZE):
            m = m + w[i, k] * (r == ch + (k - pad)).astype(jnp.float32)
        mats.append(m)
    return jnp.stack(mats, axis=0)        # (HEIGHT, C, C) f32


def _attention_from_pooled(pooled_col, convmat_ref, bias_ref, height):
    """pooled_col (C, 1) f32 -> list of `height` (C, 1) f32 softmax attention weights.

    Banded matmul on the MXU keeps C on sublanes (the layout the apply step needs);
    the softmax path only touches C values so it stays exact f32."""
    logits = []
    for i in range(height):
        li = jnp.dot(convmat_ref[i], pooled_col,
                     preferred_element_type=jnp.float32) + bias_ref[i]
        logits.append(li)                 # (C, 1) f32
    m = logits[0]
    for li in logits[1:]:
        m = jnp.maximum(m, li)
    exps = [jnp.exp(li - m) for li in logits]
    denom = exps[0]
    for e in exps[1:]:
        denom = denom + e
    inv = pl.reciprocal(denom)            # tiny path -> keep exact
    return [e * inv for e in exps]


# --------------------------------------------------------------------------- fused
def _make_fused_kernel(height, inv_hw, compute_dtype, bt):
    def kernel(bias_ref, convmat_ref, *rest):
        # bias_ref    : (height,)       f32 SMEM
        # convmat_ref : (height, C, C)  f32 VMEM (resident, constant index map)
        # rest        : x_0..x_{h-1} (bt, C, HW) native dtype, out (bt, C, HW)
        x_refs = rest[:height]
        o_ref = rest[height]
        for b in range(bt):
            # Global average pool of feats_sum over HW (f32).
            pooled = jnp.sum(x_refs[0][b].astype(jnp.float32), axis=-1, keepdims=True)
            for xr in x_refs[1:]:
                pooled = pooled + jnp.sum(xr[b].astype(jnp.float32), axis=-1,
                                          keepdims=True)
            pooled = pooled * inv_hw                               # (C, 1) f32
            attn = _attention_from_pooled(pooled, convmat_ref, bias_ref, height)
            # Apply: out = sum_i attn_i * x_i  (lane-broadcast multiply-add).
            acc = x_refs[0][b].astype(compute_dtype) * attn[0].astype(compute_dtype)
            for i in range(1, height):
                acc = acc + (x_refs[i][b].astype(compute_dtype)
                             * attn[i].astype(compute_dtype))
            o_ref[b] = acc.astype(o_ref.dtype)
    return kernel


# ------------------------------------------------------------------------ fallback
def _make_pool_attn_kernel(height, inv_hw, thw):
    fold = (thw % 128 == 0) and (thw // 128 <= 64)

    def kernel(bias_ref, convmat_ref, *rest):
        x_refs = rest[:height]
        attn_ref = rest[height]            # (C, height) block (batch squeezed)
        acc_ref = rest[height + 1]         # (C, 128) f32 scratch
        h = pl.program_id(1)

        @pl.when(h == 0)
        def _init():
            acc_ref[...] = jnp.zeros_like(acc_ref)

        tile = x_refs[0][...].astype(jnp.float32)
        for xr in x_refs[1:]:
            tile = tile + xr[...].astype(jnp.float32)
        if fold:
            # 128-lane chunked VPU adds; the single cross-lane reduce happens at finalize.
            part = tile[:, 0:128]
            for j in range(1, thw // 128):
                part = part + tile[:, j * 128:(j + 1) * 128]
            acc_ref[...] += part
        else:
            acc_ref[:, 0:1] += jnp.sum(tile, axis=-1, keepdims=True)

        @pl.when(h == pl.num_programs(1) - 1)
        def _finalize():
            pooled = jnp.sum(acc_ref[...], axis=-1, keepdims=True) * inv_hw   # (C, 1)
            attn = _attention_from_pooled(pooled, convmat_ref, bias_ref, height)
            for i in range(height):
                attn_ref[:, i:i + 1] = attn[i]       # emitted directly as (C, HEIGHT)
    return kernel


def _make_apply_kernel(height, compute_dtype):
    def kernel(attn_ref, *rest):
        x_refs = rest[:height]
        o_ref = rest[height]
        a = attn_ref[...].astype(compute_dtype)                    # (bt, C, height)
        acc = x_refs[0][...].astype(compute_dtype) * a[..., 0:1]
        for i in range(1, height):
            acc = acc + x_refs[i][...].astype(compute_dtype) * a[..., i:i + 1]
        o_ref[...] = acc.astype(o_ref.dtype)
    return kernel


# --------------------------------------------------------------------- tile pickers
def _pick_hw_tile(hw, c, height, itemsize, budget_bytes):
    per_lane = c * itemsize * (height + 1) * 2 + c * 4    # dbl-buffered blocks + f32 temp
    for t in (65536, 32768, 16384, 8192, 4096, 2048, 1024, 512, 256, 128):
        if t <= hw and hw % t == 0 and t * per_lane <= budget_bytes:
            return t
    if hw % 128 == 0 and 128 * per_lane <= budget_bytes:
        return 128
    return hw


def _pick_batch_tile(b, per_batch_step_bytes, budget_bytes, target_bytes):
    best = 1
    for bt in range(1, b + 1):
        if b % bt:
            continue
        if 2 * bt * per_batch_step_bytes > budget_bytes:
            break
        best = bt
        if bt * per_batch_step_bytes >= target_bytes:
            break
    return best


def _fused_batch_tile(b, per_batch_bytes, budget_bytes, target_bytes):
    best = 1
    for bt in range(1, b + 1):
        if b % bt:
            continue
        if 2 * bt * per_batch_bytes > budget_bytes:
            break
        if b >= 2 and b // bt < 2:
            break            # keep >= 2 grid steps so both v7x TensorCores get work
        best = bt
        if bt * per_batch_bytes >= target_bytes:
            break
    return best


# -------------------------------------------------------------------------- wrapper
def skfusion_v2(in_feats, weight, bias, *, force_two_pass=False):
    """JAX/Pallas equivalent of SKFusionv2.forward.

    in_feats : list of HEIGHT arrays, each (B, C, H, W) NCHW (native dtype kept)
    weight   : (HEIGHT, 1, KSIZE) Conv1d weight
    bias     : (HEIGHT,)          Conv1d bias
    returns  : (B, C, H, W), same dtype as the inputs
    """
    assert len(in_feats) == HEIGHT
    B, C, H, W = in_feats[0].shape
    HW = H * W
    dtype = in_feats[0].dtype
    itemsize = jnp.dtype(dtype).itemsize
    # bf16 stays bf16 through the multiply-add (v6e/v7x native); everything else f32.
    compute_dtype = dtype if dtype == jnp.bfloat16 else jnp.float32

    xs = [f.reshape(B, C, HW) for f in in_feats]          # metadata-only reshape
    convmat = _conv_band_matrices(weight, C)              # (HEIGHT, C, C) f32
    bvec = bias.reshape(HEIGHT).astype(jnp.float32)

    cap = _vmem_capacity_bytes()
    vmem_limit = min((cap * 3) // 4, 112 * 1024 * 1024)   # ~48 MiB v7x, ~96 MiB v5e/v6e
    data_budget = (vmem_limit * 3) // 4                   # headroom for compiler scratch

    inv_hw = 1.0 / float(HW)
    convmat_bytes = HEIGHT * C * C * 4
    pool_tmp_bytes = C * HW * 4                           # f32 pooling temporary
    per_batch_bytes = (HEIGHT + 1) * C * HW * itemsize    # HEIGHT inputs + 1 output
    xs_budget = data_budget - 2 * convmat_bytes - pool_tmp_bytes

    fused_ok = (not force_two_pass) and (2 * per_batch_bytes <= xs_budget)

    if fused_ok:
        # ---- Single fused pass: pool -> Conv1d gate -> softmax -> weighted sum. ----
        bt = _fused_batch_tile(B, per_batch_bytes, xs_budget, _STEP_TRAFFIC_TARGET)
        out = pl.pallas_call(
            _make_fused_kernel(HEIGHT, inv_hw, compute_dtype, bt),
            out_shape=jax.ShapeDtypeStruct((B, C, HW), dtype),
            grid_spec=pltpu.PrefetchScalarGridSpec(
                num_scalar_prefetch=0,
                grid=(B // bt,),
                in_specs=[
                    pl.BlockSpec(memory_space=pltpu.MemorySpace.SMEM),      # bias
                    pl.BlockSpec((HEIGHT, C, C), lambda b: (0, 0, 0)),      # conv band
                ] + [pl.BlockSpec((bt, C, HW), lambda b: (b, 0, 0))
                     for _ in range(HEIGHT)],
                out_specs=pl.BlockSpec((bt, C, HW), lambda b: (b, 0, 0)),
            ),
            compiler_params=pltpu.CompilerParams(
                dimension_semantics=("parallel",),
                vmem_limit_bytes=vmem_limit),
        )(bvec, convmat, *xs)
        return out.reshape(B, C, H, W)

    # ---- Fallback: per-batch working set does not fit VMEM -> two passes. ----
    thw = _pick_hw_tile(HW, C, HEIGHT, itemsize, data_budget)
    n_hw = HW // thw

    attn = pl.pallas_call(
        _make_pool_attn_kernel(HEIGHT, inv_hw, thw),
        out_shape=jax.ShapeDtypeStruct((B, C, HEIGHT), jnp.float32),
        grid_spec=pltpu.PrefetchScalarGridSpec(
            num_scalar_prefetch=0,
            grid=(B, n_hw),
            in_specs=[
                pl.BlockSpec(memory_space=pltpu.MemorySpace.SMEM),          # bias
                pl.BlockSpec((HEIGHT, C, C), lambda b, h: (0, 0, 0)),       # conv band
            ] + [pl.BlockSpec((None, C, thw), lambda b, h: (b, 0, h))
                 for _ in range(HEIGHT)],
            out_specs=pl.BlockSpec((None, C, HEIGHT), lambda b, h: (b, 0, 0)),
            scratch_shapes=[pltpu.VMEM((C, 128), jnp.float32)],
        ),
        compiler_params=pltpu.CompilerParams(
            dimension_semantics=("parallel", "arbitrary"),
            vmem_limit_bytes=vmem_limit),
    )(bvec, convmat, *xs)

    bt2 = _pick_batch_tile(B, (HEIGHT + 1) * C * thw * itemsize,
                           data_budget, _STEP_TRAFFIC_TARGET)
    out = pl.pallas_call(
        _make_apply_kernel(HEIGHT, compute_dtype),
        out_shape=jax.ShapeDtypeStruct((B, C, HW), dtype),
        grid_spec=pltpu.PrefetchScalarGridSpec(
            num_scalar_prefetch=0,
            grid=(B // bt2, n_hw),
            in_specs=[pl.BlockSpec((bt2, C, HEIGHT), lambda b, h: (b, 0, 0))]
                    + [pl.BlockSpec((bt2, C, thw), lambda b, h: (b, 0, h))
                       for _ in range(HEIGHT)],
            out_specs=pl.BlockSpec((bt2, C, thw), lambda b, h: (b, 0, h)),
        ),
        compiler_params=pltpu.CompilerParams(
            dimension_semantics=("parallel", "parallel"),
            vmem_limit_bytes=vmem_limit),
    )(attn, *xs)
    return out.reshape(B, C, H, W)


def skfusion_v2_reference(in_feats, weight, bias):
    """Pure-JAX reference of the intended forward semantics."""
    x = jnp.stack(in_feats, axis=1).astype(jnp.float32)     # (B, height, C, H, W)
    feats_sum = jnp.sum(x, axis=1)                          # (B, C, H, W)
    pooled = jnp.mean(feats_sum, axis=(2, 3))               # (B, C)
    padded = jnp.pad(pooled, ((0, 0), (1, 1)))              # Conv1d zero padding = 1
    logits = jnp.stack(
        [bias[i]
         + weight[i, 0, 0] * padded[:, :-2]
         + weight[i, 0, 1] * padded[:, 1:-1]
         + weight[i, 0, 2] * padded[:, 2:]
         for i in range(HEIGHT)],
        axis=1)                                             # (B, height, C)
    attn = jax.nn.softmax(logits, axis=1)
    return jnp.sum(x * attn[:, :, :, None, None], axis=1)   # (B, C, H, W)


if __name__ == "__main__":
    key = jax.random.PRNGKey(0)
    k1, k2, k3, k4 = jax.random.split(key, 4)

    B, C, H, W = 2, 16, 16, 16   # dim = C = 16
    x0 = jax.random.normal(k1, (B, C, H, W), jnp.float32)
    x1 = jax.random.normal(k2, (B, C, H, W), jnp.float32)

    # Deterministic synthetic Conv1d parameters: weight (height, 1, ksize), bias (height,)
    conv_w = jax.random.normal(k3, (HEIGHT, 1, KSIZE), jnp.float32) * 0.5
    conv_b = jax.random.normal(k4, (HEIGHT,), jnp.float32) * 0.1

    ref = skfusion_v2_reference([x0, x1], conv_w, conv_b)

    # Primary fused path (taken whenever the per-batch working set fits VMEM).
    out_fused = jax.block_until_ready(skfusion_v2([x0, x1], conv_w, conv_b))
    assert out_fused.shape == (B, C, H, W)
    assert jnp.allclose(out_fused, ref, atol=1e-4, rtol=1e-4), "fused kernel mismatch"

    # Two-pass fallback path (exercised explicitly so both code paths are validated).
    out_2p = jax.block_until_ready(
        skfusion_v2([x0, x1], conv_w, conv_b, force_two_pass=True))
    assert jnp.allclose(out_2p, ref, atol=1e-4, rtol=1e-4), "two-pass kernel mismatch"

    print("KERNEL_OK")
</pallas_src>

<mosaic_0001>
module attributes {stable_mosaic.version = 11 : i64} {
  func.func @kernel(%arg0: i32, %arg1: memref<2xf32, #tpu.memory_space<smem>>, %arg2: memref<2x16x16xf32, #tpu.memory_space<vmem>>, %arg3: memref<1x16x256xf32, #tpu.memory_space<vmem>>, %arg4: memref<1x16x256xf32, #tpu.memory_space<vmem>>, %arg5: memref<1x16x256xf32, #tpu.memory_space<vmem>>) attributes {dimension_semantics = [#tpu.dimension_semantics<parallel>], iteration_bounds = array<i64: 2>, scalar_prefetch = 0 : i64, scratch_operands = 0 : i64, tpu.core_type = #tpu.core_type<tc>, window_params = [{transform_indices = @transform_0, window_bounds = array<i64: 2>}, {pipeline_mode = #tpu.pipeline_mode<synchronous>, transform_indices = @transform_1, window_bounds = array<i64: 2, 16, 16>}, {transform_indices = @transform_2, window_bounds = array<i64: 1, 16, 256>}, {transform_indices = @transform_3, window_bounds = array<i64: 1, 16, 256>}, {transform_indices = @transform_4, window_bounds = array<i64: 1, 16, 256>}]} {
    %c0 = arith.constant 0 : index
    %c0_0 = arith.constant 0 : index
    %c0_1 = arith.constant 0 : index
    %0 = vector.load %arg3[%c0, %c0_0, %c0_1] : memref<1x16x256xf32, #tpu.memory_space<vmem>>, vector<1x16x256xf32>
    %1 = vector.shape_cast %0 : vector<1x16x256xf32> to vector<16x256xf32>
    %cst = arith.constant dense<0.000000e+00> : vector<16xf32>
    %2 = vector.multi_reduction <add>, %1, %cst [1] : vector<16x256xf32> to vector<16xf32>
    %3 = vector.shape_cast %2 : vector<16xf32> to vector<16x1xf32>
    %c0_2 = arith.constant 0 : index
    %c0_3 = arith.constant 0 : index
    %c0_4 = arith.constant 0 : index
    %4 = vector.load %arg4[%c0_2, %c0_3, %c0_4] : memref<1x16x256xf32, #tpu.memory_space<vmem>>, vector<1x16x256xf32>
    %5 = vector.shape_cast %4 : vector<1x16x256xf32> to vector<16x256xf32>
    %cst_5 = arith.constant dense<0.000000e+00> : vector<16xf32>
    %6 = vector.multi_reduction <add>, %5, %cst_5 [1] : vector<16x256xf32> to vector<16xf32>
    %7 = vector.shape_cast %6 : vector<16xf32> to vector<16x1xf32>
    %8 = arith.addf %3, %7 : vector<16x1xf32>
    %cst_6 = arith.constant 3.906250e-03 : f32
    %9 = vector.broadcast %cst_6 : f32 to vector<16x1xf32>
    %10 = arith.mulf %8, %9 : vector<16x1xf32>
    %c0_7 = arith.constant 0 : index
    %c0_8 = arith.constant 0 : index
    %c0_9 = arith.constant 0 : index
    %11 = vector.load %arg2[%c0_7, %c0_8, %c0_9] : memref<2x16x16xf32, #tpu.memory_space<vmem>>, vector<1x16x16xf32>
    %12 = vector.shape_cast %11 : vector<1x16x16xf32> to vector<16x16xf32>
    %cst_10 = arith.constant dense<0.000000e+00> : vector<16x1xf32>
    %13 = tpu.matmul %12, %10, %cst_10 {dimension_numbers = #tpu.dot_dimension_numbers<[1], [0], [0], [1], [0, 0, 1, 1], [], []>} : vector<16x16xf32>, vector<16x1xf32>, vector<16x1xf32> -> vector<16x1xf32>
    %c0_11 = arith.constant 0 : index
    %14 = memref.load %arg1[%c0_11] : memref<2xf32, #tpu.memory_space<smem>>
    %15 = vector.broadcast %14 : f32 to vector<16x1xf32>
    %16 = arith.addf %13, %15 : vector<16x1xf32>
    %c1 = arith.constant 1 : index
    %c0_12 = arith.constant 0 : index
    %c0_13 = arith.constant 0 : index
    %17 = vector.load %arg2[%c1, %c0_12, %c0_13] : memref<2x16x16xf32, #tpu.memory_space<vmem>>, vector<1x16x16xf32>
    %18 = vector.shape_cast %17 : vector<1x16x16xf32> to vector<16x16xf32>
    %cst_14 = arith.constant dense<0.000000e+00> : vector<16x1xf32>
    %19 = tpu.matmul %18, %10, %cst_14 {dimension_numbers = #tpu.dot_dimension_numbers<[1], [0], [0], [1], [0, 0, 1, 1], [], []>} : vector<16x16xf32>, vector<16x1xf32>, vector<16x1xf32> -> vector<16x1xf32>
    %c1_15 = arith.constant 1 : index
    %20 = memref.load %arg1[%c1_15] : memref<2xf32, #tpu.memory_space<smem>>
    %21 = vector.broadcast %20 : f32 to vector<16x1xf32>
    %22 = arith.addf %19, %21 : vector<16x1xf32>
    %23 = arith.maximumf %16, %22 : vector<16x1xf32>
    %24 = arith.subf %16, %23 : vector<16x1xf32>
    %25 = math.exp %24 : vector<16x1xf32>
    %26 = arith.subf %22, %23 : vector<16x1xf32>
    %27 = math.exp %26 : vector<16x1xf32>
    %28 = arith.addf %25, %27 : vector<16x1xf32>
    %29 = tpu.reciprocal %28 : vector<16x1xf32> -> vector<16x1xf32>
    %30 = arith.mulf %25, %29 : vector<16x1xf32>
    %31 = arith.mulf %27, %29 : vector<16x1xf32>
    %c0_16 = arith.constant 0 : index
    %c0_17 = arith.constant 0 : index
    %c0_18 = arith.constant 0 : index
    %32 = vector.load %arg3[%c0_16, %c0_17, %c0_18] : memref<1x16x256xf32, #tpu.memory_space<vmem>>, vector<1x16x256xf32>
    %33 = vector.shape_cast %32 : vector<1x16x256xf32> to vector<16x256xf32>
    %34 = vector.broadcast %30 : vector<16x1xf32> to vector<16x256xf32>
    %35 = arith.mulf %33, %34 : vector<16x256xf32>
    %c0_19 = arith.constant 0 : index
    %c0_20 = arith.constant 0 : index
    %c0_21 = arith.constant 0 : index
    %36 = vector.load %arg4[%c0_19, %c0_20, %c0_21] : memref<1x16x256xf32, #tpu.memory_space<vmem>>, vector<1x16x256xf32>
    %37 = vector.shape_cast %36 : vector<1x16x256xf32> to vector<16x256xf32>
    %38 = vector.broadcast %31 : vector<16x1xf32> to vector<16x256xf32>
    %39 = arith.mulf %37, %38 : vector<16x256xf32>
    %40 = arith.addf %35, %39 : vector<16x256xf32>
    %c0_22 = arith.constant 0 : index
    %c0_23 = arith.constant 0 : index
    %c0_24 = arith.constant 0 : index
    %41 = vector.load %arg5[%c0_22, %c0_23, %c0_24] : memref<1x16x256xf32, #tpu.memory_space<vmem>>, vector<1x16x256xf32>
    %42 = vector.shape_cast %41 : vector<1x16x256xf32> to vector<16x256xf32>
    %43 = vector.shape_cast %40 : vector<16x256xf32> to vector<1x16x256xf32>
    tpu.vector_store %arg5[%c0_22, %c0_23, %c0_24], %43 {strides = array<i32>} : memref<1x16x256xf32, #tpu.memory_space<vmem>>, vector<1x16x256xf32>,
    return
  }
  func.func @transform_0(%arg0: i32) -> i32 {
    %c0_i32 = arith.constant 0 : i32
    %c0_i32_0 = arith.constant 0 : i32
    return %c0_i32 : i32
  }
  func.func @transform_1(%arg0: i32) -> (i32, i32, i32) {
    %c0_i32 = arith.constant 0 : i32
    %c0_i32_0 = arith.constant 0 : i32
    %c0_i32_1 = arith.constant 0 : i32
    %c0_i32_2 = arith.constant 0 : i32
    return %c0_i32, %c0_i32_0, %c0_i32_1 : i32, i32, i32
  }
  func.func @transform_2(%arg0: i32) -> (i32, i32, i32) {
    %c0_i32 = arith.constant 0 : i32
    %c0_i32_0 = arith.constant 0 : i32
    %c0_i32_1 = arith.constant 0 : i32
    return %arg0, %c0_i32, %c0_i32_0 : i32, i32, i32
  }
  func.func @transform_3(%arg0: i32) -> (i32, i32, i32) {
    %c0_i32 = arith.constant 0 : i32
    %c0_i32_0 = arith.constant 0 : i32
    %c0_i32_1 = arith.constant 0 : i32
    return %arg0, %c0_i32, %c0_i32_0 : i32, i32, i32
  }
  func.func @transform_4(%arg0: i32) -> (i32, i32, i32) {
    %c0_i32 = arith.constant 0 : i32
    %c0_i32_0 = arith.constant 0 : i32
    %c0_i32_1 = arith.constant 0 : i32
    return %arg0, %c0_i32, %c0_i32_0 : i32, i32, i32
  }
}

</mosaic_0001>

<llo_original>
// kernel: tpu_custom_call.1
$region0: #{tpu_custom_call.1}
  #allocation0 [shape = 'u32[]', space=smem, size = 0x4, offset = 0x4, fixed_abs, tag = 'smem constant byte address 0x4 - core index']
  #allocation1 [shape = 'u32[144,128]{1,0:T(1,128)}', space=vmem, size = 0x12000, scoped, tag = 'internal scratch']
  %s0 = inlined_call_operand.hbm [shape: f32[2], index: 0, kind: input, shape index: {}]
  %s1 = inlined_call_operand.hbm [shape: f32[2,16,16], index: 1, kind: input, shape index: {}]
  %s2 = inlined_call_operand.hbm [shape: f32[2,16,256], index: 2, kind: input, shape index: {}]
  %s3 = inlined_call_operand.hbm [shape: f32[2,16,256], index: 3, kind: input, shape index: {}]
  %s4 = inlined_call_operand.hbm [shape: f32[2,16,256], index: 4, kind: output, shape index: {}]
  %s5 = sld [smem:[#allocation0]]
  $region65: #{tpu_custom_call.1} parent=0
    _
  %s7 = ssub.s32 1, %s5
  %s8 = scalar_select 0, %s7, %s5
  $region1: #{tpu_custom_call.1} parent=0
    #allocation2 [shape = 'u8[512]{0}', space=smem, size = 0x200, scoped, tag = 'input window, operand 0, single buffered']
    #allocation3 [shape = 's32[2]{0}', space=sflag, size = 0x8, scoped, tag = 'scoped memory for tpu_custom_call.1']
    #allocation4 [shape = 's32[2]{0}', space=sflag, size = 0x8, scoped, tag = 'scoped memory for tpu_custom_call.1']
    #allocation5 [shape = 's32[2]{0}', space=sflag, size = 0x8, scoped, tag = 'scoped memory for tpu_custom_call.1']
    #allocation6 [shape = 'u8[16384]{0}', space=vmem, size = 0x4000, scoped, tag = 'input window, operand 1, single buffered']
    #allocation7 [shape = 'u8[32768]{0}', space=vmem, size = 0x8000, scoped, tag = 'input window, operand 2']
    #allocation8 [shape = 's32[2]{0}', space=sflag, size = 0x8, scoped, tag = 'scoped memory for tpu_custom_call.1']
    #allocation9 [shape = 'u8[32768]{0}', space=vmem, size = 0x8000, scoped, tag = 'input window, operand 3']
    #allocation10 [shape = 'u8[32768]{0}', space=vmem, size = 0x8000, scoped, tag = 'output window, operand 0']
    %9 = vsyncpa [#allocation5], 0
    %10 = vsyncpa [#allocation3], 0
    %11 = vsyncpa [#allocation8], 0
    %s12 = scalar_lea.sflag [#allocation8], 1
    %13 = vsyncpa %s12, 0
    %14 = vsyncpa [#allocation4], 0
    %s15 = scalar_lea.sflag [#allocation4], 1
    %16 = vsyncpa %s15, 0
    loop: start=0, step=1, limit=4
    $region2: #{tpu_custom_call.1} parent=1 // loop_pre_header
      _
    $region3: #{tpu_custom_call.1} parent=1 // loop_header
      %s18 = sphi 0, %s22
      %p19 = scmp.ge.s32.totalorder %s18, 4
      %s26 = sphi 0, %s26
      %s28 = sphi 0, %s26
      %s29 = sphi 0, %s28
      %s43 = sphi 0, %s29
      %s47 = sphi 0, %s47
      %s49 = sphi 0, %s47
      %s50 = sphi 0, %s49
      %s64 = sphi 0, %s50
      %s70 = sphi 0, %s72
      %s73 = sphi 0, %s70
      %s74 = sphi 0, %s73
      %s90 = sphi 0, %s74
      %s96 = sphi 0, %s98
      %s99 = sphi 0, %s96
      %s100 = sphi 0, %s99
      %s116 = sphi 0, %s100
      %s122 = sphi 0, %s124
      %s125 = sphi 0, %s122
      %s126 = sphi 0, %s125
      %s142 = sphi 0, %s126
    $region4: #{tpu_custom_call.1} parent=1 // loop_header_branch
      %21 = sbr.rel (%p19) target = $region8
    $region5: #{tpu_custom_call.1} parent=1 // loop_body
      %s23 = ssub.s32 %s18, 1
      %s24 = ssub.s32 %s18, 2
      %s25 = sadd.s32 %s18, 1
      %s27 = sadd.s32 %s26, 1
      %p30 = scmp.eq.s32.totalorder %s18, 1
      %p31 = scmp.ne.s32.totalorder %s26, %s28
      %p32 = scmp.eq.s32.totalorder %s18, 0
      %p33 = por %p31, %p32
      %p34 = scmp.ne.s32.totalorder %s26, %s28
      %p35 = scmp.eq.s32.totalorder %s23, 1
      %p36 = por %p34, %p35
      %p37 = scmp.ne.s32.totalorder %s28, %s29
      %p38 = scmp.eq.s32.totalorder %s23, 0
      %p39 = por %p37, %p38
      %p40 = scmp.ne.s32.totalorder %s28, %s29
      %p41 = scmp.eq.s32.totalorder %s24, 1
      %p42 = por %p40, %p41
      %p44 = scmp.ne.s32.totalorder %s29, %s43
      %p45 = scmp.eq.s32.totalorder %s24, 0
      %p46 = por %p44, %p45
      %s48 = sadd.s32 %s47, 1
      %p51 = scmp.eq.s32.totalorder %s18, 1
      %p52 = scmp.ne.s32.totalorder %s47, %s49
      %p53 = scmp.eq.s32.totalorder %s18, 0
      %p54 = por %p52, %p53
      %p55 = scmp.ne.s32.totalorder %s47, %s49
      %p56 = scmp.eq.s32.totalorder %s23, 1
      %p57 = por %p55, %p56
      %p58 = scmp.ne.s32.totalorder %s49, %s50
      %p59 = scmp.eq.s32.totalorder %s23, 0
      %p60 = por %p58, %p59
      %p61 = scmp.ne.s32.totalorder %s49, %s50
      %p62 = scmp.eq.s32.totalorder %s24, 1
      %p63 = por %p61, %p62
      %p65 = scmp.ne.s32.totalorder %s50, %s64
      %p66 = scmp.eq.s32.totalorder %s24, 0
      %p67 = por %p65, %p66
      %s68 = ssub.s32 %s18, %s25
      %p69 = scmp.eq.s32.totalorder %s68, 0
      %s71 = sadd.s32 %s70, 1
      %s72 = scalar_select %p69, %s70, %s71
      %p75 = pneg %p69
      %p76 = scmp.eq.s32.totalorder %s18, 1
      %p77 = por %p75, %p76
      %p78 = scmp.ne.s32.totalorder %s70, %s73
      %p79 = scmp.eq.s32.totalorder %s18, 0
      %p80 = por %p78, %p79
      %p81 = scmp.ne.s32.totalorder %s70, %s73
      %p82 = scmp.eq.s32.totalorder %s23, 1
      %p83 = por %p81, %p82
      %p84 = scmp.ne.s32.totalorder %s73, %s74
      %p85 = scmp.eq.s32.totalorder %s23, 0
      %p86 = por %p84, %p85
      %p87 = scmp.ne.s32.totalorder %s73, %s74
      %p88 = scmp.eq.s32.totalorder %s24, 1
      %p89 = por %p87, %p88
      %p91 = scmp.ne.s32.totalorder %s74, %s90
      %p92 = scmp.eq.s32.totalorder %s24, 0
      %p93 = por %p91, %p92
      %s94 = ssub.s32 %s18, %s25
      %p95 = scmp.eq.s32.totalorder %s94, 0
      %s97 = sadd.s32 %s96, 1
      %s98 = scalar_select %p95, %s96, %s97
      %p101 = pneg %p95
      %p102 = scmp.eq.s32.totalorder %s18, 1
      %p103 = por %p101, %p102
      %p104 = scmp.ne.s32.totalorder %s96, %s99
      %p105 = scmp.eq.s32.totalorder %s18, 0
      %p106 = por %p104, %p105
      %p107 = scmp.ne.s32.totalorder %s96, %s99
      %p108 = scmp.eq.s32.totalorder %s23, 1
      %p109 = por %p107, %p108
      %p110 = scmp.ne.s32.totalorder %s99, %s100
      %p111 = scmp.eq.s32.totalorder %s23, 0
      %p112 = por %p110, %p111
      %p113 = scmp.ne.s32.totalorder %s99, %s100
      %p114 = scmp.eq.s32.totalorder %s24, 1
      %p115 = por %p113, %p114
      %p117 = scmp.ne.s32.totalorder %s100, %s116
      %p118 = scmp.eq.s32.totalorder %s24, 0
      %p119 = por %p117, %p118
      %s120 = ssub.s32 %s18, %s25
      %p121 = scmp.eq.s32.totalorder %s120, 0
      %s123 = sadd.s32 %s122, 1
      %s124 = scalar_select %p121, %s122, %s123
      %p127 = pneg %p121
      %p128 = scmp.eq.s32.totalorder %s18, 1
      %p129 = por %p127, %p128
      %p130 = scmp.ne.s32.totalorder %s122, %s125
      %p131 = scmp.eq.s32.totalorder %s18, 0
      %p132 = por %p130, %p131
      %p133 = scmp.ne.s32.totalorder %s122, %s125
      %p134 = scmp.eq.s32.totalorder %s23, 1
      %p135 = por %p133, %p134
      %p136 = scmp.ne.s32.totalorder %s125, %s126
      %p137 = scmp.eq.s32.totalorder %s23, 0
      %p138 = por %p136, %p137
      %p139 = scmp.ne.s32.totalorder %s125, %s126
      %p140 = scmp.eq.s32.totalorder %s24, 1
      %p141 = por %p139, %p140
      %p143 = scmp.ne.s32.totalorder %s126, %s142
      %p144 = scmp.eq.s32.totalorder %s24, 0
      %p145 = por %p143, %p144
      %p146 = scmp.le.s32.totalorder 1, %s18
      %p147 = scmp.lt.s32.totalorder %s18, 3
      %p148 = pnand %p146, %p147
      %p149 = pneg %p148
      // Predicated region
      $region9: #{tpu_custom_call.1} parent=5 // pred_check
        _
      $region10: #{tpu_custom_call.1} parent=5 // pred_check_branch
        %151 = sbr.rel (%p148) target = $region12
      $region11: #{tpu_custom_call.1} parent=5 // pred_region
        %s152 = ssub.s32 %s18, 1
        // Predicated region
        $region13: #{tpu_custom_call.1} parent=11 // pred_check
          %p153 = pneg %p39
        $region14: #{tpu_custom_call.1} parent=11 // pred_check_branch
          %155 = sbr.rel (%p153) target = $region16
        $region15: #{tpu_custom_call.1} parent=11 // pred_region
          %s157 = ssub.s32 16, 16
          %158 = vsyncadd [#allocation5], %s157
          %161 = dma.hbm_to_smem %s0, 16, [#allocation2], [#allocation5]
        $region16: #{tpu_custom_call.1} parent=11 // pred_fallthru
          _
        // Predicated region
        $region17: #{tpu_custom_call.1} parent=11 // pred_check
          %p162 = pneg %p60
        $region18: #{tpu_custom_call.1} parent=11 // pred_check_branch
          %164 = sbr.rel (%p162) target = $region20
        $region19: #{tpu_custom_call.1} parent=11 // pred_region
          %s166 = ssub.s32 512, 512
          %167 = vsyncadd [#allocation3], %s166
          %s168 = sshll.u32 [#allocation6], 4
          %s169 = int_to_ptr.vmem [resolvable:$true] %s168
          %174 = dma.hbm_to_vmem [thread:$0]  %s1, 512, %s169, [#allocation3], 128, 128, 8
        $region20: #{tpu_custom_call.1} parent=11 // pred_fallthru
          _
      $region12: #{tpu_custom_call.1} parent=5 // pred_fallthru
        _
      %p175 = scmp.lt.s32.totalorder %s18, 2
      // Predicated region
      $region21: #{tpu_custom_call.1} parent=5 // pred_check
        %p176 = pneg %p175
      $region22: #{tpu_custom_call.1} parent=5 // pred_check_branch
        %178 = sbr.rel (%p176) target = $region24
      $region23: #{tpu_custom_call.1} parent=5 // pred_region
        // Predicated region
        $region25: #{tpu_custom_call.1} parent=23 // pred_check
          %p179 = pneg %p80
        $region26: #{tpu_custom_call.1} parent=23 // pred_check_branch
          %181 = sbr.rel (%p179) target = $region28
        $region27: #{tpu_custom_call.1} parent=23 // pred_region
          %s182 = sand.u32 %s18, 1
          %s183 = scalar_lea.sflag [#allocation8], %s182
          %s184 = sand.u32 %s70, 1
          %s185 = smul.addr %s184, 32
          %s186 = scalar_lea.vmem [#allocation7], %s185
          %s188 = ssub.s32 512, 512
          %189 = vsyncadd %s183, %s188
          %s190 = smul.addr %s18, 4
          %s191 = smul.addr %s190, 128
          %s192 = scalar_lea.hbm %s2, %s191
          %s193 = sshll.u32 %s186, 4
          %s194 = int_to_ptr.vmem [resolvable:$true] %s193
          %199 = dma.hbm_to_vmem [thread:$0]  %s192, 512, %s194, %s183, 256, 256, 16
        $region28: #{tpu_custom_call.1} parent=23 // pred_fallthru
          _
        // Predicated region
        $region29: #{tpu_custom_call.1} parent=23 // pred_check
          %p200 = pneg %p106
        $region30: #{tpu_custom_call.1} parent=23 // pred_check_branch
          %202 = sbr.rel (%p200) target = $region32
        $region31: #{tpu_custom_call.1} parent=23 // pred_region
          %s203 = sand.u32 %s18, 1
          %s204 = scalar_lea.sflag [#allocation8], %s203
          %s205 = sand.u32 %s96, 1
          %s206 = smul.addr %s205, 32
          %s207 = scalar_lea.vmem [#allocation9], %s206
          %s209 = ssub.s32 512, 512
          %210 = vsyncadd %s204, %s209
          %s211 = smul.addr %s18, 4
          %s212 = smul.addr %s211, 128
          %s213 = scalar_lea.hbm %s3, %s212
          %s214 = sshll.u32 %s207, 4
          %s215 = int_to_ptr.vmem [resolvable:$true] %s214
          %220 = dma.hbm_to_vmem [thread:$0]  %s213, 512, %s215, %s204, 256, 256, 16
        $region32: #{tpu_custom_call.1} parent=23 // pred_fallthru
          _
      $region24: #{tpu_custom_call.1} parent=5 // pred_fallthru
        _
      %p221 = scmp.le.s32.totalorder 1, %s18
      %p222 = scmp.lt.s32.totalorder %s18, 3
      %p223 = pnand %p221, %p222
      %p224 = pneg %p223
      // Predicated region
      $region33: #{tpu_custom_call.1} parent=5 // pred_check
        _
      $region34: #{tpu_custom_call.1} parent=5 // pred_check_branch
        %226 = sbr.rel (%p223) target = $region36
      $region35: #{tpu_custom_call.1} parent=5 // pred_region
        %s227 = ssub.s32 %s18, 1
        // Predicated region
        $region37: #{tpu_custom_call.1} parent=35 // pred_check
          %p228 = pneg %p39
        $region38: #{tpu_custom_call.1} parent=35 // pred_check_branch
          %230 = sbr.rel (%p228) target = $region40
        $region39: #{tpu_custom_call.1} parent=35 // pred_region
          %231 = dma.done [#allocation5], 16
        $region40: #{tpu_custom_call.1} parent=35 // pred_fallthru
          _
        // Predicated region
        $region41: #{tpu_custom_call.1} parent=35 // pred_check
          %p232 = pneg %p60
        $region42: #{tpu_custom_call.1} parent=35 // pred_check_branch
          %234 = sbr.rel (%p232) target = $region44
        $region43: #{tpu_custom_call.1} parent=35 // pred_region
          %235 = dma.done [#allocation3], 512
        $region44: #{tpu_custom_call.1} parent=35 // pred_fallthru
          _
        %s236 = sand.u32 %s23, 1
        %s237 = scalar_lea.sflag [#allocation8], %s236
        %s238 = sand.u32 %s73, 1
        %s239 = smul.addr %s238, 32
        %s240 = scalar_lea.vmem [#allocation7], %s239
        // Predicated region
        $region45: #{tpu_custom_call.1} parent=35 // pred_check
          %p241 = pneg %p86
        $region46: #{tpu_custom_call.1} parent=35 // pred_check_branch
          %243 = sbr.rel (%p241) target = $region48
        $region47: #{tpu_custom_call.1} parent=35 // pred_region
          %244 = dma.done %s237, 512
        $region48: #{tpu_custom_call.1} parent=35 // pred_fallthru
          _
        %s245 = sand.u32 %s23, 1
        %s246 = scalar_lea.sflag [#allocation8], %s245
        %s247 = sand.u32 %s99, 1
        %s248 = smul.addr %s247, 32
        %s249 = scalar_lea.vmem [#allocation9], %s248
        // Predicated region
        $region49: #{tpu_custom_call.1} parent=35 // pred_check
          %p250 = pneg %p112
        $region50: #{tpu_custom_call.1} parent=35 // pred_check_branch
          %252 = sbr.rel (%p250) target = $region52
        $region51: #{tpu_custom_call.1} parent=35 // pred_region
          %253 = dma.done %s246, 512
        $region52: #{tpu_custom_call.1} parent=35 // pred_fallthru
          _
        %254 = sfence
        %p255 = pneg %p39
        %p256 = pneg %p36
        %p257 = pneg %p60
        %p258 = pneg %p57
        %s259 = sand.u32 %s23, 1
        %s260 = scalar_lea.sflag [#allocation8], %s259
        %s261 = sand.u32 %s73, 1
        %s262 = smul.addr %s261, 32
        %s263 = scalar_lea.vmem [#allocation7], %s262
        %p264 = pneg %p86
        %p265 = pneg %p83
        %s266 = sand.u32 %s23, 1
        %s267 = scalar_lea.sflag [#allocation8], %s266
        %s268 = sand.u32 %s99, 1
        %s269 = smul.addr %s268, 32
        %s270 = scalar_lea.vmem [#allocation9], %s269
        %p271 = pneg %p112
        %p272 = pneg %p109
        %p273 = pneg %p138
        %p274 = pneg %p135
        %s275 = sand.u32 %s125, 1
        %s276 = scalar_lea.sflag [#allocation4], %s275
        %s277 = sand.u32 %s125, 1
        %s278 = smul.addr %s277, 32
        %s279 = scalar_lea.vmem [#allocation10], %s278
        %v280 = vld [vmem:[%s240] sm:$0xff]
        %v281 = vld [vmem:[%s240 + $0x8] sm:$0xff]
        %v282 = vld [vmem:[%s240 + $0x10] sm:$0xff]
        %v283 = vld [vmem:[%s240 + $0x18] sm:$0xff]
        %v284 = vadd.f32 %v280, %v281
        %285 = vadd.xlane.f32.xlu0 %v284
        %v286 = vpop.xlane.xlu0 %285
        %v287 = vadd.f32 %v282, %v283
        %288 = vadd.xlane.f32.xlu0 %v287
        %v289 = vpop.xlane.xlu0 %288
        %v290 = vld [vmem:[%s249] sm:$0xff]
        %v291 = vld [vmem:[%s249 + $0x8] sm:$0xff]
        %v292 = vld [vmem:[%s249 + $0x10] sm:$0xff]
        %v293 = vld [vmem:[%s249 + $0x18] sm:$0xff]
        %v294 = vadd.f32 %v290, %v291
        %295 = vadd.xlane.f32.xlu0 %v294
        %v296 = vpop.xlane.xlu0 %295
        %v297 = vadd.f32 %v292, %v293
        %298 = vadd.xlane.f32.xlu0 %v297
        %v299 = vpop.xlane.xlu0 %298
        %v300 = vadd.f32 %v286, %v296
        %v301 = vadd.f32 %v289, %v299
        %v302 = vmul.f32 %v300, 0.00390625
        %v303 = vmul.f32 %v301, 0.00390625
        %v304 = vld [vmem:[#allocation6] sm:$0xff]
        %v305 = vld [vmem:[#allocation6 + $0x8] sm:$0xff]
        %s306 = sld [smem:[#allocation2]]
        %v307 = vstv %s306
        %vm308 = vcmask 130048
        %v310 = vsel %vm308, %v304, 0
        %v313 = vsel %vm308, %v305, 0
        %315 = vmatprep.subr.mxu0 0.0
        %316 = vmatpush1.msra.mxu0 %v302
        %317 = vmatprep.subr.mxu0 0.0
        %318 = vmatpush1.msra.mxu0 %v303
        %319 = vmatprep.subr.mxu0 0.0
        %320 = vmatpush1.msra.mxu0 0.0
        %321 = vmatprep.subr.mxu0 0.0
        %322 = vmatpush1.msra.mxu0 0.0
        %323 = vmatprep.subr.mxu0 0.0
        %324 = vmatpush1.msra.mxu0 0.0
        %325 = vmatprep.subr.mxu0 0.0
        %326 = vmatpush1.msra.mxu0 0.0
        %327 = vmatprep.subr.mxu0 0.0
        %328 = vmatpush1.msra.mxu0 0.0
        %329 = vmatprep.subr.mxu0 0.0
        %330 = vmatpush1.msra.mxu0 0.0
        %331 = vmatprep.subr.mxu0 0.0
        %332 = vmatpush1.msra.mxu0 0.0
        %333 = vmatprep.subr.mxu0 0.0
        %334 = vmatpush1.msra.mxu0 0.0
        %335 = vmatprep.subr.mxu0 0.0
        %336 = vmatpush1.msra.mxu0 0.0
        %337 = vmatprep.subr.mxu0 0.0
        %338 = vmatpush1.msra.mxu0 0.0
        %339 = vmatprep.subr.mxu0 0.0
        %340 = vmatpush1.msra.mxu0 0.0
        %341 = vmatprep.subr.mxu0 0.0
        %342 = vmatpush1.msra.mxu0 0.0
        %343 = vmatprep.subr.mxu0 0.0
        %344 = vmatpush1.msra.mxu0 0.0
        %345 = vmatprep.subr.mxu0 0.0
        %346 = vmatpush1.msra.mxu0 0.0
        %347 = vmatprep.subr.mxu0 0.0
        %348 = vmatpush1.msra.mxu0 0.0
        %349 = vmatprep.subr.mxu0 0.0
        %350 = vmatpush1.msra.mxu0 0.0
        %351 = vmatprep.subr.mxu0 0.0
        %352 = vmatpush1.msra.mxu0 0.0
        %353 = vmatprep.subr.mxu0 0.0
        %354 = vmatpush1.msra.mxu0 0.0
        %355 = vmatprep.subr.mxu0 0.0
        %356 = vmatpush1.msra.mxu0 0.0
        %357 = vmatprep.subr.mxu0 0.0
        %358 = vmatpush1.msra.mxu0 0.0
        %359 = vmatprep.subr.mxu0 0.0
        %360 = vmatpush1.msra.mxu0 0.0
        %361 = vmatprep.subr.mxu0 0.0
        %362 = vmatpush1.msra.mxu0 0.0
        %363 = vmatprep.subr.mxu0 0.0
        %364 = vmatpush1.msra.mxu0 0.0
        %365 = vmatprep.subr.mxu0 0.0
        %366 = vmatpush1.msra.mxu0 0.0
        %367 = vmatprep.subr.mxu0 0.0
        %368 = vmatpush1.msra.mxu0 0.0
        %369 = vmatprep.subr.mxu0 0.0
        %370 = vmatpush1.msra.mxu0 0.0
        %371 = vmatprep.subr.mxu0 0.0
        %372 = vmatpush1.msra.mxu0 0.0
        %373 = vmatprep.subr.mxu0 0.0
        %374 = vmatpush1.msra.mxu0 0.0
        %375 = vmatprep.subr.mxu0 0.0
        %376 = vmatpush1.msra.mxu0 0.0
        %377 = vmatprep.subr.mxu0 0.0
        %378 = vmatpush1.msra.mxu0 0.0
        %379 = vmatprep.mubr.f32.mxu0 0.0
        %380 = vmatmul.mubr.f32.gmra.mrb[0].mxu0 %v310
        %v381 = vpop.f32.mrb[0].mxu0
        %v382 = vadd.f32 %v307, %v381
        %v383 = vpop.f32.mrb[0].mxu0
        %384 = vmatprep.mubr.f32.mxu0 0.0
        %385 = vmatmul.mubr.f32.gmra.mrb[0].mxu0 %v313
        %v386 = vpop.f32.mrb[0].mxu0
        %v387 = vadd.f32 %v307, %v386
        %v388 = vpop.f32.mrb[0].mxu0
        %389 = vdwg.mxu0
        %s390 = scalar_lea.vmem [#allocation6], 16
        %v391 = vld [vmem:[%s390] sm:$0xff]
        %v392 = vld [vmem:[%s390 + $0x8] sm:$0xff]
        %s393 = sld [smem:[#allocation2 + $0x1]]
        %v394 = vstv %s393
        %v396 = vsel %vm308, %v391, 0
        %v399 = vsel %vm308, %v392, 0
        %401 = vmatprep.subr.mxu0 0.0
        %402 = vmatpush1.msra.mxu0 %v302
        %403 = vmatprep.subr.mxu0 0.0
        %404 = vmatpush1.msra.mxu0 %v303
        %405 = vmatprep.subr.mxu0 0.0
        %406 = vmatpush1.msra.mxu0 0.0
        %407 = vmatprep.subr.mxu0 0.0
        %408 = vmatpush1.msra.mxu0 0.0
        %409 = vmatprep.subr.mxu0 0.0
        %410 = vmatpush1.msra.mxu0 0.0
        %411 = vmatprep.subr.mxu0 0.0
        %412 = vmatpush1.msra.mxu0 0.0
        %413 = vmatprep.subr.mxu0 0.0
        %414 = vmatpush1.msra.mxu0 0.0
        %415 = vmatprep.subr.mxu0 0.0
        %416 = vmatpush1.msra.mxu0 0.0
        %417 = vmatprep.subr.mxu0 0.0
        %418 = vmatpush1.msra.mxu0 0.0
        %419 = vmatprep.subr.mxu0 0.0
        %420 = vmatpush1.msra.mxu0 0.0
        %421 = vmatprep.subr.mxu0 0.0
        %422 = vmatpush1.msra.mxu0 0.0
        %423 = vmatprep.subr.mxu0 0.0
        %424 = vmatpush1.msra.mxu0 0.0
        %425 = vmatprep.subr.mxu0 0.0
        %426 = vmatpush1.msra.mxu0 0.0
        %427 = vmatprep.subr.mxu0 0.0
        %428 = vmatpush1.msra.mxu0 0.0
        %429 = vmatprep.subr.mxu0 0.0
        %430 = vmatpush1.msra.mxu0 0.0
        %431 = vmatprep.subr.mxu0 0.0
        %432 = vmatpush1.msra.mxu0 0.0
        %433 = vmatprep.subr.mxu0 0.0
        %434 = vmatpush1.msra.mxu0 0.0
        %435 = vmatprep.subr.mxu0 0.0
        %436 = vmatpush1.msra.mxu0 0.0
        %437 = vmatprep.subr.mxu0 0.0
        %438 = vmatpush1.msra.mxu0 0.0
        %439 = vmatprep.subr.mxu0 0.0
        %440 = vmatpush1.msra.mxu0 0.0
        %441 = vmatprep.subr.mxu0 0.0
        %442 = vmatpush1.msra.mxu0 0.0
        %443 = vmatprep.subr.mxu0 0.0
        %444 = vmatpush1.msra.mxu0 0.0
        %445 = vmatprep.subr.mxu0 0.0
        %446 = vmatpush1.msra.mxu0 0.0
        %447 = vmatprep.subr.mxu0 0.0
        %448 = vmatpush1.msra.mxu0 0.0
        %449 = vmatprep.subr.mxu0 0.0
        %450 = vmatpush1.msra.mxu0 0.0
        %451 = vmatprep.subr.mxu0 0.0
        %452 = vmatpush1.msra.mxu0 0.0
        %453 = vmatprep.subr.mxu0 0.0
        %454 = vmatpush1.msra.mxu0 0.0
        %455 = vmatprep.subr.mxu0 0.0
        %456 = vmatpush1.msra.mxu0 0.0
        %457 = vmatprep.subr.mxu0 0.0
        %458 = vmatpush1.msra.mxu0 0.0
        %459 = vmatprep.subr.mxu0 0.0
        %460 = vmatpush1.msra.mxu0 0.0
        %461 = vmatprep.subr.mxu0 0.0
        %462 = vmatpush1.msra.mxu0 0.0
        %463 = vmatprep.subr.mxu0 0.0
        %464 = vmatpush1.msra.mxu0 0.0
        %465 = vmatprep.mubr.f32.mxu0 0.0
        %466 = vmatmul.mubr.f32.gmra.mrb[0].mxu0 %v396
        %v467 = vpop.f32.mrb[0].mxu0
        %v468 = vadd.f32 %v394, %v467
        %v469 = vpop.f32.mrb[0].mxu0
        %470 = vmatprep.mubr.f32.mxu0 0.0
        %471 = vmatmul.mubr.f32.gmra.mrb[0].mxu0 %v399
        %v472 = vpop.f32.mrb[0].mxu0
        %v473 = vadd.f32 %v394, %v472
        %v474 = vpop.f32.mrb[0].mxu0
        %475 = vdwg.mxu0
        %v476 = vmax.f32 %v382, %v468
        %v477 = vmax.f32 %v387, %v473
        %v478 = vsub.f32 %v382, %v476
        %v479 = vsub.f32 %v387, %v477
        %v480 = vmul.f32 %v478, 1.442695
        %v481 = vpow.pop %v480
        %v482 = vmul.f32 %v479, 1.442695
        %v483 = vpow.pop %v482
        %v484 = vsub.f32 %v468, %v476
        %v485 = vsub.f32 %v473, %v477
        %v486 = vmul.f32 %v484, 1.442695
        %v487 = vpow.pop %v486
        %v488 = vmul.f32 %v485, 1.442695
        %v489 = vpow.pop %v488
        %v490 = vadd.f32 %v481, %v487
        %v491 = vadd.f32 %v483, %v489
        %v492 = vrcp.pop %v490
        %v493 = vrcp.pop %v491
        %v494 = vmul.f32 %v481, %v492
        %v495 = vmul.f32 %v483, %v493
        %v496 = vmul.f32 %v487, %v492
        %v497 = vmul.f32 %v489, %v493
        %499 = vset.pattern.permute.xlu0 0
        %500 = vperm.xlu0 %499, %v494
        %v501 = vpop.permute.xlu0 %500
        %504 = vset.pattern.permute.xlu0 0
        %505 = vperm.xlu0 %504, %v495
        %v506 = vpop.permute.xlu0 %505
        %v508 = vmul.f32 %v280, %v501
        %v509 = vmul.f32 %v281, %v501
        %v510 = vmul.f32 %v282, %v506
        %v511 = vmul.f32 %v283, %v506
        %513 = vset.pattern.permute.xlu0 0
        %514 = vperm.xlu0 %513, %v496
        %v515 = vpop.permute.xlu0 %514
        %518 = vset.pattern.permute.xlu0 0
        %519 = vperm.xlu0 %518, %v497
        %v520 = vpop.permute.xlu0 %519
        %v522 = vmul.f32 %v290, %v515
        %v523 = vmul.f32 %v291, %v515
        %v524 = vmul.f32 %v292, %v520
        %v525 = vmul.f32 %v293, %v520
        %v526 = vadd.f32 %v508, %v522
        %v527 = vadd.f32 %v509, %v523
        %v528 = vadd.f32 %v510, %v524
        %v529 = vadd.f32 %v511, %v525
        %530 = vst [vmem:[%s279] sm:$0xff] %v526
        %531 = vst [vmem:[%s279 + $0x8] sm:$0xff] %v527
        %532 = vst [vmem:[%s279 + $0x10] sm:$0xff] %v528
        %533 = vst [vmem:[%s279 + $0x18] sm:$0xff] %v529
        %s534 = sand.u32 %s125, 1
        %s535 = scalar_lea.sflag [#allocation4], %s534
        %s536 = sand.u32 %s125, 1
        %s537 = smul.addr %s536, 32
        %s538 = scalar_lea.vmem [#allocation10], %s537
        // Predicated region
        $region53: #{tpu_custom_call.1} parent=35 // pred_check
          %p539 = pneg %p135
        $region54: #{tpu_custom_call.1} parent=35 // pred_check_branch
          %541 = sbr.rel (%p539) target = $region56
        $region55: #{tpu_custom_call.1} parent=35 // pred_region
          %s543 = ssub.s32 512, 512
          %544 = vsyncadd %s535, %s543
          %s545 = smul.addr %s23, 4
          %s546 = smul.addr %s545, 128
          %s547 = scalar_lea.hbm %s4, %s546
          %s548 = sshll.u32 %s538, 4
          %s549 = int_to_ptr.vmem [resolvable:$true] %s548
          %554 = dma.vmem_to_hbm [thread:$0]  %s549, 512, %s547, %s535, 256, 256, 16
        $region56: #{tpu_custom_call.1} parent=35 // pred_fallthru
          _
      $region36: #{tpu_custom_call.1} parent=5 // pred_fallthru
        _
      %p555 = scmp.le.s32.totalorder 2, %s18
      // Predicated region
      $region57: #{tpu_custom_call.1} parent=5 // pred_check
        %p556 = pneg %p555
      $region58: #{tpu_custom_call.1} parent=5 // pred_check_branch
        %558 = sbr.rel (%p556) target = $region60
      $region59: #{tpu_custom_call.1} parent=5 // pred_region
        %s559 = ssub.s32 %s18, 2
        // Predicated region
        $region61: #{tpu_custom_call.1} parent=59 // pred_check
          %p560 = pneg %p141
        $region62: #{tpu_custom_call.1} parent=59 // pred_check_branch
          %562 = sbr.rel (%p560) target = $region64
        $region63: #{tpu_custom_call.1} parent=59 // pred_region
          %s563 = sand.u32 %s126, 1
          %s564 = scalar_lea.sflag [#allocation4], %s563
          %s565 = sand.u32 %s126, 1
          %s566 = smul.addr %s565, 32
          %s567 = scalar_lea.vmem [#allocation10], %s566
          %568 = dma.done %s564, 512
        $region64: #{tpu_custom_call.1} parent=59 // pred_fallthru
          _
      $region60: #{tpu_custom_call.1} parent=5 // pred_fallthru
        _
    $region6: #{tpu_custom_call.1} parent=1 // loop_footer
      %s22 = sadd.s32 1, %s18
    $region7: #{tpu_custom_call.1} parent=1 // loop_footer_branch
      %17 = sbr.rel target = $region3
    $region8: #{tpu_custom_call.1} parent=1 // loop_exit
      _
    %569 = vsyncpa [#allocation3], 1
    %s570 = scalar_lea.sflag [#allocation3], 1
    %571 = vsyncpa %s570, 1
    %572 = vsyncpa [#allocation8], 1
    %s573 = scalar_lea.sflag [#allocation8], 1
    %574 = vsyncpa %s573, 1
    %575 = vsyncpa [#allocation4], 1
    %s576 = scalar_lea.sflag [#allocation4], 1
    %577 = vsyncpa %s576, 1
    %578 = vsyncpa [#allocation5], 1
    %s579 = scalar_lea.sflag [#allocation5], 1
    %580 = vsyncpa %s579, 1

</llo_original>
